<compile_context>
chip_gen: v7x
topology: tpu7x:2x2x1
jax: 0.10.0
libtpu: 0.0.40
codegen_flags: <defaults>
</compile_context>

<pallas_src>
import jax
import jax.numpy as jnp
from jax.experimental import pallas as pl
from jax.experimental.pallas import tpu as pltpu


def mlp_kernel(x_ref, params_ref, b2_ref, y_ref):
    # x_ref      : (1, B_pad)   VMEM  -- input feature on sublane 0, batch on lanes
    # params_ref : (hidden, 3)  VMEM  -- columns [w1 | b1 | w2^T]
    # b2_ref     : (1,)         SMEM  -- scalar output bias
    # y_ref      : (1, B_pad)   VMEM  -- lane-dense output
    x = x_ref[...]                       # (1, B_pad)
    p = params_ref[...]                  # (hidden, 3)
    w1c = p[:, 0:1]                      # (hidden, 1)
    b1c = p[:, 1:2]                      # (hidden, 1)
    w2c = p[:, 2:3]                      # (hidden, 1)

    # Layer 1: (N,1)@(1,H) is an outer product -> pure VPU broadcast multiply-add.
    z = w1c * x + b1c                    # (hidden, B_pad)
    u = jax.nn.sigmoid(z)                # EUP transcendental, f32

    # Layer 2: (N,H)@(H,1) -> VPU multiply + cross-sublane (XLU) reduce.
    v = jnp.sum(u * w2c, axis=0, keepdims=True) + b2_ref[0]   # (1, B_pad)
    y_ref[...] = jax.nn.sigmoid(v).astype(y_ref.dtype)


def simple_two_layer(x, w1, b1, w2, b2):
    """Forward pass of SimpleTwoLayer with PyTorch nn.Linear parameter layout.

    x : (N, 1)        w1: (hidden, 1)   b1: (hidden,)
    w2: (1, hidden)   b2: (1,)
    Returns (N, 1) float32.
    """
    n, input_size = x.shape
    hidden = w1.shape[0]
    out_size = w2.shape[0]
    assert input_size == 1 and out_size == 1, "kernel specialized to 1 -> H -> 1"

    lane = 128
    b_pad = ((n + lane - 1) // lane) * lane          # 400 -> 512 (4 * 128 lanes)

    # Lane-dense, transposed activation layout (wrapper-side glue).
    x_t = jnp.zeros((1, b_pad), jnp.float32).at[:, :n].set(x.astype(jnp.float32).T)

    # Pack all per-hidden parameters into one VMEM tile: [w1 | b1 | w2^T].
    params = jnp.concatenate(
        [
            w1.astype(jnp.float32).reshape(hidden, 1),
            b1.astype(jnp.float32).reshape(hidden, 1),
            w2.astype(jnp.float32).T.reshape(hidden, 1),
        ],
        axis=1,
    )                                                # (hidden, 3)

    y_t = pl.pallas_call(
        mlp_kernel,
        out_shape=jax.ShapeDtypeStruct((out_size, b_pad), jnp.float32),
        in_specs=[
            pl.BlockSpec(memory_space=pltpu.MemorySpace.VMEM),   # x_t
            pl.BlockSpec(memory_space=pltpu.MemorySpace.VMEM),   # packed params
            pl.BlockSpec(memory_space=pltpu.MemorySpace.SMEM),   # b2 scalar
        ],
        out_specs=pl.BlockSpec(memory_space=pltpu.MemorySpace.VMEM),
    )(x_t, params, b2.astype(jnp.float32))

    return y_t[:, :n].T                              # back to (N, 1)


def reference(x, w1, b1, w2, b2):
    z = x @ w1.T + b1
    u = jax.nn.sigmoid(z)
    return jax.nn.sigmoid(u @ w2.T + b2)


if __name__ == "__main__":
    # Config implied by the original script: x = arange(-2, 2, 0.01).view(-1, 1)
    input_size, hidden_size, output_size = 1, 32, 1

    x = jnp.arange(-2.0, 2.0, 0.01, dtype=jnp.float32).reshape(-1, 1)   # (400, 1)
    batch = x.shape[0]

    key = jax.random.PRNGKey(0)
    kw1, kb1, kw2, kb2 = jax.random.split(key, 4)

    # Deterministic PyTorch-nn.Linear-style uniform init, stored in (out, in) layout.
    bound1 = 1.0 / jnp.sqrt(jnp.float32(input_size))
    bound2 = 1.0 / jnp.sqrt(jnp.float32(hidden_size))
    w1 = jax.random.uniform(kw1, (hidden_size, input_size), jnp.float32, -bound1, bound1)
    b1 = jax.random.uniform(kb1, (hidden_size,), jnp.float32, -bound1, bound1)
    w2 = jax.random.uniform(kw2, (output_size, hidden_size), jnp.float32, -bound2, bound2)
    b2 = jax.random.uniform(kb2, (output_size,), jnp.float32, -bound2, bound2)

    y = simple_two_layer(x, w1, b1, w2, b2)
    y = jax.block_until_ready(y)

    y_ref = reference(x, w1, b1, w2, b2)
    assert y.shape == (batch, output_size)
    assert jnp.allclose(y, y_ref, atol=1e-5, rtol=1e-5)

    print("KERNEL_OK")
</pallas_src>

<mosaic_0001>
module attributes {stable_mosaic.version = 11 : i64} {
  func.func @mlp_kernel(%arg0: memref<1x512xf32, #tpu.memory_space<vmem>>, %arg1: memref<32x3xf32, #tpu.memory_space<vmem>>, %arg2: memref<1xf32, #tpu.memory_space<smem>>, %arg3: memref<1x512xf32, #tpu.memory_space<vmem>>) attributes {dimension_semantics = [], scalar_prefetch = 0 : i64, scratch_operands = 0 : i64, tpu.core_type = #tpu.core_type<tc>} {
    %c0 = arith.constant 0 : index
    %c0_0 = arith.constant 0 : index
    %0 = vector.load %arg0[%c0, %c0_0] : memref<1x512xf32, #tpu.memory_space<vmem>>, vector<1x512xf32>
    %c0_1 = arith.constant 0 : index
    %c0_2 = arith.constant 0 : index
    %1 = vector.load %arg1[%c0_1, %c0_2] : memref<32x3xf32, #tpu.memory_space<vmem>>, vector<32x3xf32>
    %2 = vector.extract_strided_slice %1 {offsets = [0, 0], sizes = [32, 1], strides = [1, 1]} : vector<32x3xf32> to vector<32x1xf32>
    %3 = vector.extract_strided_slice %1 {offsets = [0, 1], sizes = [32, 1], strides = [1, 1]} : vector<32x3xf32> to vector<32x1xf32>
    %4 = vector.extract_strided_slice %1 {offsets = [0, 2], sizes = [32, 1], strides = [1, 1]} : vector<32x3xf32> to vector<32x1xf32>
    %5 = vector.broadcast %2 : vector<32x1xf32> to vector<32x512xf32>
    %6 = vector.broadcast %0 : vector<1x512xf32> to vector<32x512xf32>
    %7 = arith.mulf %5, %6 : vector<32x512xf32>
    %8 = vector.broadcast %3 : vector<32x1xf32> to vector<32x512xf32>
    %9 = arith.addf %7, %8 : vector<32x512xf32>
    %10 = arith.negf %9 : vector<32x512xf32>
    %11 = math.exp %10 : vector<32x512xf32>
    %cst = arith.constant 1.000000e+00 : f32
    %12 = vector.broadcast %cst : f32 to vector<32x512xf32>
    %13 = arith.addf %12, %11 : vector<32x512xf32>
    %14 = arith.divf %12, %13 : vector<32x512xf32>
    %15 = vector.broadcast %4 : vector<32x1xf32> to vector<32x512xf32>
    %16 = arith.mulf %14, %15 : vector<32x512xf32>
    %cst_3 = arith.constant dense<0.000000e+00> : vector<512xf32>
    %17 = vector.multi_reduction <add>, %16, %cst_3 [0] : vector<32x512xf32> to vector<512xf32>
    %18 = vector.shape_cast %17 : vector<512xf32> to vector<1x512xf32>
    %c0_4 = arith.constant 0 : index
    %19 = memref.load %arg2[%c0_4] : memref<1xf32, #tpu.memory_space<smem>>
    %20 = vector.broadcast %19 : f32 to vector<1x512xf32>
    %21 = arith.addf %18, %20 : vector<1x512xf32>
    %22 = arith.negf %21 : vector<1x512xf32>
    %23 = math.exp %22 : vector<1x512xf32>
    %cst_5 = arith.constant 1.000000e+00 : f32
    %24 = vector.broadcast %cst_5 : f32 to vector<1x512xf32>
    %25 = arith.addf %24, %23 : vector<1x512xf32>
    %26 = arith.divf %24, %25 : vector<1x512xf32>
    %c0_6 = arith.constant 0 : index
    %c0_7 = arith.constant 0 : index
    %27 = vector.load %arg3[%c0_6, %c0_7] : memref<1x512xf32, #tpu.memory_space<vmem>>, vector<1x512xf32>
    tpu.vector_store %arg3[%c0_6, %c0_7], %26 {strides = array<i32>} : memref<1x512xf32, #tpu.memory_space<vmem>>, vector<1x512xf32>,
    return
  }
}

</mosaic_0001>

<llo_original>
// kernel: tpu_custom_call.1
$region0: #{tpu_custom_call.1}
  #allocation0 [shape = 'u32[]', space=smem, size = 0x4, offset = 0x4, fixed_abs, tag = 'smem constant byte address 0x4 - core index']
  #allocation1 [shape = 'u32[144,128]{1,0:T(1,128)}', space=vmem, size = 0x12000, scoped, tag = 'internal scratch']
  #allocation2 [shape = 'f32[1]{0:T(128)S(6)}', space=smem, size = 0x200, scoped, tag = 'scoped memory for tpu_custom_call.1']
  %s0 = inlined_call_operand.vmem [shape: f32[1,512], index: 0, kind: input, shape index: {}]
  %s1 = inlined_call_operand.vmem [shape: f32[32,3], index: 1, kind: input, shape index: {}]
  %s2 = inlined_call_operand.<no memory space> [shape: f32[1], index: 2, kind: input, shape index: {}]
  %s3 = inlined_call_operand.hbm [shape: f32[1,512], index: 3, kind: output, shape index: {}]
  %s4 = sld [smem:[#allocation0]]
  $region22: #{tpu_custom_call.1} parent=0
    _
  %s6 = ssub.s32 1, %s4
  %s7 = scalar_select 0, %s6, %s4
  %8 = sst [smem:[#allocation2]] %s2
  $region1: #{tpu_custom_call.1} parent=0
    #allocation3 [shape = 'u8[2048]{0}', space=vmem, size = 0x800, scoped, tag = 'output window, operand 0, single buffered']
    #allocation4 [shape = 's32[1]{0}', space=sflag, size = 0x4, scoped, tag = 'scoped memory for tpu_custom_call.1']
    %9 = vsyncpa [#allocation4], 0
    // Predicated region
    $region2: #{tpu_custom_call.1} parent=1 // pred_check
      _
    $region3: #{tpu_custom_call.1} parent=1 // pred_check_branch
      %11 = sbr.rel (0) target = $region5
    $region4: #{tpu_custom_call.1} parent=1 // pred_region
      _
    $region5: #{tpu_custom_call.1} parent=1 // pred_fallthru
      _
    // Predicated region
    $region6: #{tpu_custom_call.1} parent=1 // pred_check
      _
    $region7: #{tpu_custom_call.1} parent=1 // pred_check_branch
      %13 = sbr.rel (0) target = $region9
    $region8: #{tpu_custom_call.1} parent=1 // pred_region
      _
    $region9: #{tpu_custom_call.1} parent=1 // pred_fallthru
      _
    // Predicated region
    $region10: #{tpu_custom_call.1} parent=1 // pred_check
      _
    $region11: #{tpu_custom_call.1} parent=1 // pred_check_branch
      %15 = sbr.rel (0) target = $region13
    $region12: #{tpu_custom_call.1} parent=1 // pred_region
      _
    $region13: #{tpu_custom_call.1} parent=1 // pred_fallthru
      _
    %v16 = vld [vmem:[%s0] sm:$0xf]
    %v17 = vld [vmem:[%s1] sm:$0xff]
    %v18 = vld [vmem:[%s1 + $0x8] sm:$0xff]
    %v19 = vld [vmem:[%s1 + $0x10] sm:$0xff]
    %v20 = vld [vmem:[%s1 + $0x18] sm:$0xff]
    %22 = vset.pattern.permute.xlu0 0
    %23 = vperm.xlu0 %22, %v17
    %v24 = vpop.permute.xlu0 %23
    %27 = vset.pattern.permute.xlu0 0
    %28 = vperm.xlu0 %27, %v18
    %v29 = vpop.permute.xlu0 %28
    %32 = vset.pattern.permute.xlu0 0
    %33 = vperm.xlu0 %32, %v19
    %v34 = vpop.permute.xlu0 %33
    %37 = vset.pattern.permute.xlu0 0
    %38 = vperm.xlu0 %37, %v20
    %v39 = vpop.permute.xlu0 %38
    %v42 = vlaneseq
    %v43 = vshrl.u32 %v42, 7
    %v44 = vsub.s32 0, %v43
    %v45 = vrot.slane %v16, %v44
    %v46 = vlaneseq
    %v47 = vshrl.u32 %v46, 7
    %v48 = vsub.s32 1, %v47
    %v49 = vrot.slane %v16, %v48
    %v50 = vlaneseq
    %v51 = vshrl.u32 %v50, 7
    %v52 = vsub.s32 2, %v51
    %v53 = vrot.slane %v16, %v52
    %v54 = vlaneseq
    %v55 = vshrl.u32 %v54, 7
    %v56 = vsub.s32 3, %v55
    %v57 = vrot.slane %v16, %v56
    %v62 = vmul.f32 %v24, %v45
    %v63 = vmul.f32 %v24, %v49
    %v64 = vmul.f32 %v24, %v53
    %v65 = vmul.f32 %v24, %v57
    %v66 = vmul.f32 %v29, %v45
    %v67 = vmul.f32 %v29, %v49
    %v68 = vmul.f32 %v29, %v53
    %v69 = vmul.f32 %v29, %v57
    %v70 = vmul.f32 %v34, %v45
    %v71 = vmul.f32 %v34, %v49
    %v72 = vmul.f32 %v34, %v53
    %v73 = vmul.f32 %v34, %v57
    %v74 = vmul.f32 %v39, %v45
    %v75 = vmul.f32 %v39, %v49
    %v76 = vmul.f32 %v39, %v53
    %v77 = vmul.f32 %v39, %v57
    %78 = vset.pattern.permute.xlu0 1
    %79 = vperm.xlu0 %78, %v17
    %v80 = vpop.permute.xlu0 %79
    %82 = vset.pattern.permute.xlu0 1
    %83 = vperm.xlu0 %82, %v18
    %v84 = vpop.permute.xlu0 %83
    %86 = vset.pattern.permute.xlu0 1
    %87 = vperm.xlu0 %86, %v19
    %v88 = vpop.permute.xlu0 %87
    %90 = vset.pattern.permute.xlu0 1
    %91 = vperm.xlu0 %90, %v20
    %v92 = vpop.permute.xlu0 %91
    %v94 = vadd.f32 %v62, %v80
    %v95 = vadd.f32 %v63, %v80
    %v96 = vadd.f32 %v64, %v80
    %v97 = vadd.f32 %v65, %v80
    %v98 = vadd.f32 %v66, %v84
    %v99 = vadd.f32 %v67, %v84
    %v100 = vadd.f32 %v68, %v84
    %v101 = vadd.f32 %v69, %v84
    %v102 = vadd.f32 %v70, %v88
    %v103 = vadd.f32 %v71, %v88
    %v104 = vadd.f32 %v72, %v88
    %v105 = vadd.f32 %v73, %v88
    %v106 = vadd.f32 %v74, %v92
    %v107 = vadd.f32 %v75, %v92
    %v108 = vadd.f32 %v76, %v92
    %v109 = vadd.f32 %v77, %v92
    %v110 = vxor.u32 %v94, 2147483648
    %v111 = vxor.u32 %v95, 2147483648
    %v112 = vxor.u32 %v96, 2147483648
    %v113 = vxor.u32 %v97, 2147483648
    %v114 = vxor.u32 %v98, 2147483648
    %v115 = vxor.u32 %v99, 2147483648
    %v116 = vxor.u32 %v100, 2147483648
    %v117 = vxor.u32 %v101, 2147483648
    %v118 = vxor.u32 %v102, 2147483648
    %v119 = vxor.u32 %v103, 2147483648
    %v120 = vxor.u32 %v104, 2147483648
    %v121 = vxor.u32 %v105, 2147483648
    %v122 = vxor.u32 %v106, 2147483648
    %v123 = vxor.u32 %v107, 2147483648
    %v124 = vxor.u32 %v108, 2147483648
    %v125 = vxor.u32 %v109, 2147483648
    %v126 = vmul.f32 %v110, 1.442695
    %v127 = vpow.pop %v126
    %v128 = vmul.f32 %v111, 1.442695
    %v129 = vpow.pop %v128
    %v130 = vmul.f32 %v112, 1.442695
    %v131 = vpow.pop %v130
    %v132 = vmul.f32 %v113, 1.442695
    %v133 = vpow.pop %v132
    %v134 = vmul.f32 %v114, 1.442695
    %v135 = vpow.pop %v134
    %v136 = vmul.f32 %v115, 1.442695
    %v137 = vpow.pop %v136
    %v138 = vmul.f32 %v116, 1.442695
    %v139 = vpow.pop %v138
    %v140 = vmul.f32 %v117, 1.442695
    %v141 = vpow.pop %v140
    %v142 = vmul.f32 %v118, 1.442695
    %v143 = vpow.pop %v142
    %v144 = vmul.f32 %v119, 1.442695
    %v145 = vpow.pop %v144
    %v146 = vmul.f32 %v120, 1.442695
    %v147 = vpow.pop %v146
    %v148 = vmul.f32 %v121, 1.442695
    %v149 = vpow.pop %v148
    %v150 = vmul.f32 %v122, 1.442695
    %v151 = vpow.pop %v150
    %v152 = vmul.f32 %v123, 1.442695
    %v153 = vpow.pop %v152
    %v154 = vmul.f32 %v124, 1.442695
    %v155 = vpow.pop %v154
    %v156 = vmul.f32 %v125, 1.442695
    %v157 = vpow.pop %v156
    %v158 = vadd.f32 %v127, 1.0
    %v159 = vadd.f32 %v129, 1.0
    %v160 = vadd.f32 %v131, 1.0
    %v161 = vadd.f32 %v133, 1.0
    %v162 = vadd.f32 %v135, 1.0
    %v163 = vadd.f32 %v137, 1.0
    %v164 = vadd.f32 %v139, 1.0
    %v165 = vadd.f32 %v141, 1.0
    %v166 = vadd.f32 %v143, 1.0
    %v167 = vadd.f32 %v145, 1.0
    %v168 = vadd.f32 %v147, 1.0
    %v169 = vadd.f32 %v149, 1.0
    %v170 = vadd.f32 %v151, 1.0
    %v171 = vadd.f32 %v153, 1.0
    %v172 = vadd.f32 %v155, 1.0
    %v173 = vadd.f32 %v157, 1.0
    %v174 = vrcp.pop %v158
    %v175 = vmul.f32 1.0, %v174
    %v176 = vrcp.pop %v159
    %v177 = vmul.f32 1.0, %v176
    %v178 = vrcp.pop %v160
    %v179 = vmul.f32 1.0, %v178
    %v180 = vrcp.pop %v161
    %v181 = vmul.f32 1.0, %v180
    %v182 = vrcp.pop %v162
    %v183 = vmul.f32 1.0, %v182
    %v184 = vrcp.pop %v163
    %v185 = vmul.f32 1.0, %v184
    %v186 = vrcp.pop %v164
    %v187 = vmul.f32 1.0, %v186
    %v188 = vrcp.pop %v165
    %v189 = vmul.f32 1.0, %v188
    %v190 = vrcp.pop %v166
    %v191 = vmul.f32 1.0, %v190
    %v192 = vrcp.pop %v167
    %v193 = vmul.f32 1.0, %v192
    %v194 = vrcp.pop %v168
    %v195 = vmul.f32 1.0, %v194
    %v196 = vrcp.pop %v169
    %v197 = vmul.f32 1.0, %v196
    %v198 = vrcp.pop %v170
    %v199 = vmul.f32 1.0, %v198
    %v200 = vrcp.pop %v171
    %v201 = vmul.f32 1.0, %v200
    %v202 = vrcp.pop %v172
    %v203 = vmul.f32 1.0, %v202
    %v204 = vrcp.pop %v173
    %v205 = vmul.f32 1.0, %v204
    %206 = vset.pattern.permute.xlu0 2
    %207 = vperm.xlu0 %206, %v17
    %v208 = vpop.permute.xlu0 %207
    %210 = vset.pattern.permute.xlu0 2
    %211 = vperm.xlu0 %210, %v18
    %v212 = vpop.permute.xlu0 %211
    %214 = vset.pattern.permute.xlu0 2
    %215 = vperm.xlu0 %214, %v19
    %v216 = vpop.permute.xlu0 %215
    %218 = vset.pattern.permute.xlu0 2
    %219 = vperm.xlu0 %218, %v20
    %v220 = vpop.permute.xlu0 %219
    %v222 = vmul.f32 %v175, %v208
    %v223 = vmul.f32 %v177, %v208
    %v224 = vmul.f32 %v179, %v208
    %v225 = vmul.f32 %v181, %v208
    %v226 = vmul.f32 %v183, %v212
    %v227 = vmul.f32 %v185, %v212
    %v228 = vmul.f32 %v187, %v212
    %v229 = vmul.f32 %v189, %v212
    %v230 = vmul.f32 %v191, %v216
    %v231 = vmul.f32 %v193, %v216
    %v232 = vmul.f32 %v195, %v216
    %v233 = vmul.f32 %v197, %v216
    %v234 = vmul.f32 %v199, %v220
    %v235 = vmul.f32 %v201, %v220
    %v236 = vmul.f32 %v203, %v220
    %v237 = vmul.f32 %v205, %v220
    %v238 = vadd.f32 %v222, %v226
    %v239 = vadd.f32 %v238, %v230
    %v240 = vadd.f32 %v239, %v234
    %v241 = vrot.slane %v240, 4
    %v242 = vadd.f32 %v240, %v241
    %v243 = vrot.slane %v242, 2
    %v244 = vadd.f32 %v242, %v243
    %v245 = vrot.slane %v244, 1
    %v246 = vadd.f32 %v244, %v245
    %v247 = vadd.f32 %v223, %v227
    %v248 = vadd.f32 %v247, %v231
    %v249 = vadd.f32 %v248, %v235
    %v250 = vrot.slane %v249, 4
    %v251 = vadd.f32 %v249, %v250
    %v252 = vrot.slane %v251, 2
    %v253 = vadd.f32 %v251, %v252
    %v254 = vrot.slane %v253, 1
    %v255 = vadd.f32 %v253, %v254
    %v256 = vadd.f32 %v224, %v228
    %v257 = vadd.f32 %v256, %v232
    %v258 = vadd.f32 %v257, %v236
    %v259 = vrot.slane %v258, 4
    %v260 = vadd.f32 %v258, %v259
    %v261 = vrot.slane %v260, 2
    %v262 = vadd.f32 %v260, %v261
    %v263 = vrot.slane %v262, 1
    %v264 = vadd.f32 %v262, %v263
    %v265 = vadd.f32 %v225, %v229
    %v266 = vadd.f32 %v265, %v233
    %v267 = vadd.f32 %v266, %v237
    %v268 = vrot.slane %v267, 4
    %v269 = vadd.f32 %v267, %v268
    %v270 = vrot.slane %v269, 2
    %v271 = vadd.f32 %v269, %v270
    %v272 = vrot.slane %v271, 1
    %v273 = vadd.f32 %v271, %v272
    %s274 = sld [smem:[#allocation2]]
    %v275 = vstv %s274
    %v276 = vadd.f32 %v246, %v275
    %v277 = vadd.f32 %v255, %v275
    %v278 = vadd.f32 %v264, %v275
    %v279 = vadd.f32 %v273, %v275
    %v280 = vxor.u32 %v276, 2147483648
    %v281 = vxor.u32 %v277, 2147483648
    %v282 = vxor.u32 %v278, 2147483648
    %v283 = vxor.u32 %v279, 2147483648
    %v284 = vmul.f32 %v280, 1.442695
    %v285 = vpow.pop %v284
    %v286 = vmul.f32 %v281, 1.442695
    %v287 = vpow.pop %v286
    %v288 = vmul.f32 %v282, 1.442695
    %v289 = vpow.pop %v288
    %v290 = vmul.f32 %v283, 1.442695
    %v291 = vpow.pop %v290
    %v292 = vadd.f32 %v285, 1.0
    %v293 = vadd.f32 %v287, 1.0
    %v294 = vadd.f32 %v289, 1.0
    %v295 = vadd.f32 %v291, 1.0
    %v296 = vrcp.pop %v292
    %v297 = vmul.f32 1.0, %v296
    %v298 = vrcp.pop %v293
    %v299 = vmul.f32 1.0, %v298
    %v300 = vrcp.pop %v294
    %v301 = vmul.f32 1.0, %v300
    %v302 = vrcp.pop %v295
    %v303 = vmul.f32 1.0, %v302
    %v308 = vcombine.low %v297, %v299
    %v309 = vcombine.low %v301, %v303
    %v311 = vunpack.c.l.s4 1966171168
    %v312 = vunpack.c.0.s8 %v311
    %v313 = vlaneseq
    %v314 = vshrl.u32 %v313, 7
    %v315 = vsub.s32 %v312, %v314
    %v316 = vrot.slane %v308, %v315
    %v318 = vunpack.c.l.s4 1966171168
    %v319 = vunpack.c.0.s8 %v318
    %v320 = vlaneseq
    %v321 = vshrl.u32 %v320, 7
    %v322 = vsub.s32 %v319, %v321
    %v323 = vrot.slane %v309, %v322
    %v324 = vcombine.low %v316, %v323
    %v326 = vunpack.c.l.s4 1966171168
    %v327 = vunpack.c.0.s8 %v326
    %v328 = vlaneseq
    %v329 = vshrl.u32 %v328, 7
    %v330 = vsub.s32 %v327, %v329
    %v331 = vrot.slane %v324, %v330
    %v333 = vlaneseq
    %vm334 = vcmp.ge.s32.totalorder %v333, 0
    %vm335 = vcmp.lt.s32.totalorder %v333, 512
    %vm336 = vmand %vm334, %vm335
    %337 = vst.msk [vmem:[#allocation3] sm:$0xf] %vm336, %v331
    // Predicated region
    $region14: #{tpu_custom_call.1} parent=1 // pred_check
      _
    $region15: #{tpu_custom_call.1} parent=1 // pred_check_branch
      %339 = sbr.rel (0) target = $region17
    $region16: #{tpu_custom_call.1} parent=1 // pred_region
      %s341 = ssub.s32 64, 64
      %342 = vsyncadd [#allocation4], %s341
      %s344 = sshll.u32 [#allocation3], 4
      %s345 = int_to_ptr.vmem [resolvable:$true] %s344
      %347 = dma.vmem_to_hbm [thread:$0]  %s345, 64, %s3, [#allocation4]
    $region17: #{tpu_custom_call.1} parent=1 // pred_fallthru
      _
    // Predicated region
    $region18: #{tpu_custom_call.1} parent=1 // pred_check
      _
    $region19: #{tpu_custom_call.1} parent=1 // pred_check_branch
      %349 = sbr.rel (0) target = $region21
    $region20: #{tpu_custom_call.1} parent=1 // pred_region
      %350 = dma.done [#allocation4], 64
    $region21: #{tpu_custom_call.1} parent=1 // pred_fallthru
      _
    %351 = vsyncpa [#allocation4], 1

</llo_original>
